<compile_context>
chip_gen: v6e
topology: v6e:2x2x1
jax: 0.10.0
libtpu: 0.0.40
codegen_flags: <defaults>
</compile_context>

<pallas_src>
import jax
import jax.numpy as jnp
from jax.experimental import pallas as pl
from jax.experimental.pallas import tpu as pltpu


def _round_up(v, m):
    return ((v + m - 1) // m) * m


def _conv_lrelu_kernel(x_ref, w_ref, b_ref, o_ref):
    # x_ref: (1, Kc, Lx)         flattened, zero-padded input slab (one image)
    # w_ref: (n_shifts, Cout, Kc) regrouped weights (VMEM resident)
    # b_ref: (Cout, 1)            bias
    # o_ref: (1, Cout, Lo)        lane-dense output slab (Lo multiple of 128)
    n_shifts, c_out, _ = w_ref.shape
    lo = o_ref.shape[2]

    acc = jnp.zeros((c_out, lo), jnp.float32)
    for t in range(n_shifts):                      # static, tiny trip count
        # Static lane-axis shift of the flattened spatial axis.
        patch = x_ref[0, :, pl.ds(t, lo)]          # (Kc, Lo)
        acc = acc + jnp.dot(w_ref[t], patch,
                            preferred_element_type=jnp.float32)

    acc = acc + b_ref[...]                         # (Cout, 1) broadcasts on lanes
    acc = jnp.where(acc >= 0.0, acc, 0.1 * acc)    # LeakyReLU(0.1)
    o_ref[0] = acc.astype(o_ref.dtype)


def convblock_forward(x_nchw, weight, bias, *, stride, padding):
    """Conv2d(weight, stride, padding) + LeakyReLU(0.1), NCHW in / NCHW out.

    x_nchw: (N, Cin, H, W)      float32
    weight: (Cout, Cin, KH, KW) float32 (PyTorch layout)
    bias:   (Cout,)             float32
    returns (N, Cout, Ho, Wo)   float32
    """
    N, Cin, H, W = x_nchw.shape
    Cout, _, KH, KW = weight.shape
    s, p = stride, padding
    Ho = (H + 2 * p - KH) // s + 1
    Wo = (W + 2 * p - KW) // s + 1

    # Spatial zero-pad (layout plumbing, stays NCHW).
    x_pad = jnp.pad(x_nchw, ((0, 0), (0, 0), (p, p), (p, p)))
    Wp = x_pad.shape[3]

    # Fold the KH row-taps into the contraction (channel) axis: for each kh,
    # take the (strided) output rows it contributes to.  Pure layout work.
    rows = [x_pad[:, :, kh: kh + (Ho - 1) * s + 1: s, :] for kh in range(KH)]
    slab = jnp.stack(rows, axis=1).reshape(N, KH * Cin, Ho, Wp)

    if s == 1:
        # kw shifts handled in-kernel as static lane-axis slices (offsets 0..KW-1).
        Wcols = Wp
        n_shifts = KW
        w_g = jnp.transpose(weight, (3, 0, 2, 1)).reshape(KW, Cout, KH * Cin)
    else:
        # Space-to-depth the kw taps in the wrapper so in-kernel loads are
        # contiguous (no doubly-strided pl.ds loads).
        cols = [slab[:, :, :, kw: kw + (Wo - 1) * s + 1: s] for kw in range(KW)]
        slab = jnp.stack(cols, axis=1).reshape(N, KW * KH * Cin, Ho, Wo)
        Wcols = Wo
        n_shifts = 1
        w_g = jnp.transpose(weight, (0, 3, 2, 1)).reshape(1, Cout, KW * KH * Cin)

    Kc = slab.shape[1]
    L = Ho * Wcols                              # valid flattened output width
    Lo_pad = _round_up(L, 128)                  # lane-dense (unmasked stores)
    Lx_pad = _round_up(Lo_pad + n_shifts - 1, 128)

    # Flatten spatial onto the lane axis (contiguous -> free reshape) and
    # zero-pad the tail so every shifted slice stays in bounds.
    x_flat = slab.reshape(N, Kc, L)
    x_flat = jnp.pad(x_flat, ((0, 0), (0, 0), (0, Lx_pad - L)))

    b_2d = bias.reshape(Cout, 1).astype(jnp.float32)

    out_flat = pl.pallas_call(
        _conv_lrelu_kernel,
        out_shape=jax.ShapeDtypeStruct((N, Cout, Lo_pad), x_nchw.dtype),
        grid_spec=pltpu.PrefetchScalarGridSpec(
            num_scalar_prefetch=0,
            grid=(N,),
            in_specs=[
                pl.BlockSpec((1, Kc, Lx_pad), lambda n: (n, 0, 0)),
                pl.BlockSpec((n_shifts, Cout, Kc), lambda n: (0, 0, 0)),
                pl.BlockSpec((Cout, 1), lambda n: (0, 0)),
            ],
            out_specs=pl.BlockSpec((1, Cout, Lo_pad), lambda n: (n, 0, 0)),
        ),
        compiler_params=pltpu.CompilerParams(
            dimension_semantics=("parallel",),
            vmem_limit_bytes=32 * 1024 * 1024,
        ),
    )(x_flat, w_g, b_2d)

    # Crop lane padding and the Wp>Wo garbage columns; result is already NCHW.
    out = out_flat[:, :, :L].reshape(N, Cout, Ho, Wcols)[:, :, :, :Wo]
    return out


if __name__ == "__main__":
    # convblock(in_ch=4, out_ch=8, kernel_size=3, stride=1, padding=1)
    in_ch, out_ch, ksize = 4, 8, 3
    N, H, W = 2, 16, 16

    key = jax.random.PRNGKey(0)
    kx, kw_, kb = jax.random.split(key, 3)
    x = jax.random.normal(kx, (N, in_ch, H, W), dtype=jnp.float32)
    fan_in = in_ch * ksize * ksize
    bound = 1.0 / (fan_in ** 0.5)
    weight = jax.random.uniform(kw_, (out_ch, in_ch, ksize, ksize),
                                minval=-bound, maxval=bound, dtype=jnp.float32)
    bias = jax.random.uniform(kb, (out_ch,), minval=-bound, maxval=bound,
                              dtype=jnp.float32)

    def ref_conv(xi, stride, padding):
        r = jax.lax.conv_general_dilated(
            xi, weight, window_strides=(stride, stride),
            padding=((padding, padding), (padding, padding)),
            dimension_numbers=("NCHW", "OIHW", "NCHW")) + bias[None, :, None, None]
        return jnp.where(r >= 0.0, r, 0.1 * r)

    # stride=1 path (in-kernel lane shifts, KW fused matmuls of K=KH*Cin)
    out1 = jax.block_until_ready(
        convblock_forward(x, weight, bias, stride=1, padding=1))
    ref1 = ref_conv(x, 1, 1)
    assert out1.shape == (N, out_ch, H, W)
    assert jnp.allclose(out1, ref1, atol=2e-4, rtol=2e-4)

    # stride=2 path (space-to-depth in wrapper, single K=KH*KW*Cin matmul)
    out2 = jax.block_until_ready(
        convblock_forward(x, weight, bias, stride=2, padding=1))
    ref2 = ref_conv(x, 2, 1)
    assert out2.shape == (N, out_ch, H // 2, W // 2)
    assert jnp.allclose(out2, ref2, atol=2e-4, rtol=2e-4)

    print("KERNEL_OK")
</pallas_src>

<mosaic_0001>
module attributes {stable_mosaic.version = 11 : i64} {
  func.func @_conv_lrelu_kernel(%arg0: i32, %arg1: memref<1x12x512xf32, #tpu.memory_space<vmem>>, %arg2: memref<3x8x12xf32, #tpu.memory_space<vmem>>, %arg3: memref<8x1xf32, #tpu.memory_space<vmem>>, %arg4: memref<1x8x384xf32, #tpu.memory_space<vmem>>) attributes {dimension_semantics = [#tpu.dimension_semantics<parallel>], iteration_bounds = array<i64: 2>, scalar_prefetch = 0 : i64, scratch_operands = 0 : i64, tpu.core_type = #tpu.core_type<tc>, window_params = [{transform_indices = @transform_0, window_bounds = array<i64: 1, 12, 512>}, {pipeline_mode = #tpu.pipeline_mode<synchronous>, transform_indices = @transform_1, window_bounds = array<i64: 3, 8, 12>}, {pipeline_mode = #tpu.pipeline_mode<synchronous>, transform_indices = @transform_2, window_bounds = array<i64: 8, 1>}, {transform_indices = @transform_3, window_bounds = array<i64: 1, 8, 384>}]} {
    %cst = arith.constant 0.000000e+00 : f32
    %0 = vector.broadcast %cst : f32 to vector<8x384xf32>
    %c0 = arith.constant 0 : index
    %c0_0 = arith.constant 0 : index
    %c0_1 = arith.constant 0 : index
    %1 = vector.load %arg1[%c0, %c0_0, %c0_1] : memref<1x12x512xf32, #tpu.memory_space<vmem>>, vector<1x12x384xf32>
    %2 = vector.shape_cast %1 : vector<1x12x384xf32> to vector<12x384xf32>
    %c0_2 = arith.constant 0 : index
    %c0_3 = arith.constant 0 : index
    %c0_4 = arith.constant 0 : index
    %3 = vector.load %arg2[%c0_2, %c0_3, %c0_4] : memref<3x8x12xf32, #tpu.memory_space<vmem>>, vector<1x8x12xf32>
    %4 = vector.shape_cast %3 : vector<1x8x12xf32> to vector<8x12xf32>
    %cst_5 = arith.constant dense<0.000000e+00> : vector<8x384xf32>
    %5 = tpu.matmul %4, %2, %cst_5 {dimension_numbers = #tpu.dot_dimension_numbers<[1], [0], [0], [1], [0, 0, 1, 1], [], []>} : vector<8x12xf32>, vector<12x384xf32>, vector<8x384xf32> -> vector<8x384xf32>
    %6 = arith.addf %0, %5 : vector<8x384xf32>
    %c0_6 = arith.constant 0 : index
    %c0_7 = arith.constant 0 : index
    %c1 = arith.constant 1 : index
    %7 = vector.load %arg1[%c0_6, %c0_7, %c1] : memref<1x12x512xf32, #tpu.memory_space<vmem>>, vector<1x12x384xf32>
    %8 = vector.shape_cast %7 : vector<1x12x384xf32> to vector<12x384xf32>
    %c1_8 = arith.constant 1 : index
    %c0_9 = arith.constant 0 : index
    %c0_10 = arith.constant 0 : index
    %9 = vector.load %arg2[%c1_8, %c0_9, %c0_10] : memref<3x8x12xf32, #tpu.memory_space<vmem>>, vector<1x8x12xf32>
    %10 = vector.shape_cast %9 : vector<1x8x12xf32> to vector<8x12xf32>
    %cst_11 = arith.constant dense<0.000000e+00> : vector<8x384xf32>
    %11 = tpu.matmul %10, %8, %cst_11 {dimension_numbers = #tpu.dot_dimension_numbers<[1], [0], [0], [1], [0, 0, 1, 1], [], []>} : vector<8x12xf32>, vector<12x384xf32>, vector<8x384xf32> -> vector<8x384xf32>
    %12 = arith.addf %6, %11 : vector<8x384xf32>
    %c0_12 = arith.constant 0 : index
    %c0_13 = arith.constant 0 : index
    %c2 = arith.constant 2 : index
    %13 = vector.load %arg1[%c0_12, %c0_13, %c2] : memref<1x12x512xf32, #tpu.memory_space<vmem>>, vector<1x12x384xf32>
    %14 = vector.shape_cast %13 : vector<1x12x384xf32> to vector<12x384xf32>
    %c2_14 = arith.constant 2 : index
    %c0_15 = arith.constant 0 : index
    %c0_16 = arith.constant 0 : index
    %15 = vector.load %arg2[%c2_14, %c0_15, %c0_16] : memref<3x8x12xf32, #tpu.memory_space<vmem>>, vector<1x8x12xf32>
    %16 = vector.shape_cast %15 : vector<1x8x12xf32> to vector<8x12xf32>
    %cst_17 = arith.constant dense<0.000000e+00> : vector<8x384xf32>
    %17 = tpu.matmul %16, %14, %cst_17 {dimension_numbers = #tpu.dot_dimension_numbers<[1], [0], [0], [1], [0, 0, 1, 1], [], []>} : vector<8x12xf32>, vector<12x384xf32>, vector<8x384xf32> -> vector<8x384xf32>
    %18 = arith.addf %12, %17 : vector<8x384xf32>
    %c0_18 = arith.constant 0 : index
    %c0_19 = arith.constant 0 : index
    %19 = vector.load %arg3[%c0_18, %c0_19] : memref<8x1xf32, #tpu.memory_space<vmem>>, vector<8x1xf32>
    %20 = vector.broadcast %19 : vector<8x1xf32> to vector<8x384xf32>
    %21 = arith.addf %18, %20 : vector<8x384xf32>
    %cst_20 = arith.constant 0.000000e+00 : f32
    %22 = vector.broadcast %cst_20 : f32 to vector<8x384xf32>
    %23 = arith.cmpf oge, %21, %22 : vector<8x384xf32>
    %cst_21 = arith.constant 1.000000e-01 : f32
    %24 = vector.broadcast %cst_21 : f32 to vector<8x384xf32>
    %25 = arith.mulf %24, %21 : vector<8x384xf32>
    %26 = arith.select %23, %21, %25 : vector<8x384xi1>, vector<8x384xf32>
    %c0_22 = arith.constant 0 : index
    %c0_23 = arith.constant 0 : index
    %c0_24 = arith.constant 0 : index
    %27 = vector.load %arg4[%c0_22, %c0_23, %c0_24] : memref<1x8x384xf32, #tpu.memory_space<vmem>>, vector<1x8x384xf32>
    %28 = vector.shape_cast %27 : vector<1x8x384xf32> to vector<8x384xf32>
    %29 = vector.shape_cast %26 : vector<8x384xf32> to vector<1x8x384xf32>
    tpu.vector_store %arg4[%c0_22, %c0_23, %c0_24], %29 {strides = array<i32>} : memref<1x8x384xf32, #tpu.memory_space<vmem>>, vector<1x8x384xf32>,
    return
  }
  func.func @transform_0(%arg0: i32) -> (i32, i32, i32) {
    %c0_i32 = arith.constant 0 : i32
    %c0_i32_0 = arith.constant 0 : i32
    %c0_i32_1 = arith.constant 0 : i32
    return %arg0, %c0_i32, %c0_i32_0 : i32, i32, i32
  }
  func.func @transform_1(%arg0: i32) -> (i32, i32, i32) {
    %c0_i32 = arith.constant 0 : i32
    %c0_i32_0 = arith.constant 0 : i32
    %c0_i32_1 = arith.constant 0 : i32
    %c0_i32_2 = arith.constant 0 : i32
    return %c0_i32, %c0_i32_0, %c0_i32_1 : i32, i32, i32
  }
  func.func @transform_2(%arg0: i32) -> (i32, i32) {
    %c0_i32 = arith.constant 0 : i32
    %c0_i32_0 = arith.constant 0 : i32
    %c0_i32_1 = arith.constant 0 : i32
    return %c0_i32, %c0_i32_0 : i32, i32
  }
  func.func @transform_3(%arg0: i32) -> (i32, i32, i32) {
    %c0_i32 = arith.constant 0 : i32
    %c0_i32_0 = arith.constant 0 : i32
    %c0_i32_1 = arith.constant 0 : i32
    return %arg0, %c0_i32, %c0_i32_0 : i32, i32, i32
  }
}

</mosaic_0001>

<llo_original>
// kernel: tpu_custom_call.1
$region0: #{tpu_custom_call.1}
  #allocation0 [shape = 'u32[]', space=smem, size = 0x4, offset = 0x4, fixed_abs, tag = 'smem constant byte address 0x4 - core index']
  #allocation1 [shape = 'u32[144,128]{1,0:T(1,128)}', space=vmem, size = 0x12000, scoped, tag = 'internal scratch']
  %s0 = inlined_call_operand.vmem [shape: f32[2,12,512], index: 0, kind: input, shape index: {}]
  %s1 = inlined_call_operand.vmem [shape: f32[3,8,12], index: 1, kind: input, shape index: {}]
  %s2 = inlined_call_operand.vmem [shape: f32[8,1], index: 2, kind: input, shape index: {}]
  %s3 = inlined_call_operand.hbm [shape: f32[2,8,384], index: 3, kind: output, shape index: {}]
  %s4 = sld [smem:[#allocation0]]
  $region45: #{tpu_custom_call.1} parent=0
    _
  %s6 = ssub.s32 1, %s4
  %s7 = scalar_select 0, %s6, %s4
  $region1: #{tpu_custom_call.1} parent=0
    #allocation2 [shape = 'u8[24576]{0}', space=vmem, size = 0x6000, scoped, tag = 'output window, operand 0']
    #allocation3 [shape = 's32[2]{0}', space=sflag, size = 0x8, scoped, tag = 'scoped memory for tpu_custom_call.1']
    %8 = vsyncpa [#allocation3], 0
    %s9 = scalar_lea.sflag [#allocation3], 1
    %10 = vsyncpa %s9, 0
    loop: start=0, step=1, limit=4
    $region2: #{tpu_custom_call.1} parent=1 // loop_pre_header
      _
    $region3: #{tpu_custom_call.1} parent=1 // loop_header
      %s12 = sphi 0, %s16
      %p13 = scmp.ge.s32.totalorder %s12, 4
      %s22 = sphi 0, %s24
      %s25 = sphi 0, %s22
      %s26 = sphi 0, %s25
      %s42 = sphi 0, %s26
      %s46 = sphi 0, %s46
      %s48 = sphi 0, %s46
      %s49 = sphi 0, %s48
      %s63 = sphi 0, %s49
      %s67 = sphi 0, %s67
      %s69 = sphi 0, %s67
      %s70 = sphi 0, %s69
      %s84 = sphi 0, %s70
      %s90 = sphi 0, %s92
      %s93 = sphi 0, %s90
      %s94 = sphi 0, %s93
      %s110 = sphi 0, %s94
    $region4: #{tpu_custom_call.1} parent=1 // loop_header_branch
      %15 = sbr.rel (%p13) target = $region8
    $region5: #{tpu_custom_call.1} parent=1 // loop_body
      %s17 = ssub.s32 %s12, 1
      %s18 = ssub.s32 %s12, 2
      %s19 = sadd.s32 %s12, 1
      %s20 = ssub.s32 %s12, %s19
      %p21 = scmp.eq.s32.totalorder %s20, 0
      %s23 = sadd.s32 %s22, 1
      %s24 = scalar_select %p21, %s22, %s23
      %p27 = pneg %p21
      %p28 = scmp.eq.s32.totalorder %s12, 1
      %p29 = por %p27, %p28
      %p30 = scmp.ne.s32.totalorder %s22, %s25
      %p31 = scmp.eq.s32.totalorder %s12, 0
      %p32 = por %p30, %p31
      %p33 = scmp.ne.s32.totalorder %s22, %s25
      %p34 = scmp.eq.s32.totalorder %s17, 1
      %p35 = por %p33, %p34
      %p36 = scmp.ne.s32.totalorder %s25, %s26
      %p37 = scmp.eq.s32.totalorder %s17, 0
      %p38 = por %p36, %p37
      %p39 = scmp.ne.s32.totalorder %s25, %s26
      %p40 = scmp.eq.s32.totalorder %s18, 1
      %p41 = por %p39, %p40
      %p43 = scmp.ne.s32.totalorder %s26, %s42
      %p44 = scmp.eq.s32.totalorder %s18, 0
      %p45 = por %p43, %p44
      %s47 = sadd.s32 %s46, 1
      %p50 = scmp.eq.s32.totalorder %s12, 1
      %p51 = scmp.ne.s32.totalorder %s46, %s48
      %p52 = scmp.eq.s32.totalorder %s12, 0
      %p53 = por %p51, %p52
      %p54 = scmp.ne.s32.totalorder %s46, %s48
      %p55 = scmp.eq.s32.totalorder %s17, 1
      %p56 = por %p54, %p55
      %p57 = scmp.ne.s32.totalorder %s48, %s49
      %p58 = scmp.eq.s32.totalorder %s17, 0
      %p59 = por %p57, %p58
      %p60 = scmp.ne.s32.totalorder %s48, %s49
      %p61 = scmp.eq.s32.totalorder %s18, 1
      %p62 = por %p60, %p61
      %p64 = scmp.ne.s32.totalorder %s49, %s63
      %p65 = scmp.eq.s32.totalorder %s18, 0
      %p66 = por %p64, %p65
      %s68 = sadd.s32 %s67, 1
      %p71 = scmp.eq.s32.totalorder %s12, 1
      %p72 = scmp.ne.s32.totalorder %s67, %s69
      %p73 = scmp.eq.s32.totalorder %s12, 0
      %p74 = por %p72, %p73
      %p75 = scmp.ne.s32.totalorder %s67, %s69
      %p76 = scmp.eq.s32.totalorder %s17, 1
      %p77 = por %p75, %p76
      %p78 = scmp.ne.s32.totalorder %s69, %s70
      %p79 = scmp.eq.s32.totalorder %s17, 0
      %p80 = por %p78, %p79
      %p81 = scmp.ne.s32.totalorder %s69, %s70
      %p82 = scmp.eq.s32.totalorder %s18, 1
      %p83 = por %p81, %p82
      %p85 = scmp.ne.s32.totalorder %s70, %s84
      %p86 = scmp.eq.s32.totalorder %s18, 0
      %p87 = por %p85, %p86
      %s88 = ssub.s32 %s12, %s19
      %p89 = scmp.eq.s32.totalorder %s88, 0
      %s91 = sadd.s32 %s90, 1
      %s92 = scalar_select %p89, %s90, %s91
      %p95 = pneg %p89
      %p96 = scmp.eq.s32.totalorder %s12, 1
      %p97 = por %p95, %p96
      %p98 = scmp.ne.s32.totalorder %s90, %s93
      %p99 = scmp.eq.s32.totalorder %s12, 0
      %p100 = por %p98, %p99
      %p101 = scmp.ne.s32.totalorder %s90, %s93
      %p102 = scmp.eq.s32.totalorder %s17, 1
      %p103 = por %p101, %p102
      %p104 = scmp.ne.s32.totalorder %s93, %s94
      %p105 = scmp.eq.s32.totalorder %s17, 0
      %p106 = por %p104, %p105
      %p107 = scmp.ne.s32.totalorder %s93, %s94
      %p108 = scmp.eq.s32.totalorder %s18, 1
      %p109 = por %p107, %p108
      %p111 = scmp.ne.s32.totalorder %s94, %s110
      %p112 = scmp.eq.s32.totalorder %s18, 0
      %p113 = por %p111, %p112
      %p114 = scmp.le.s32.totalorder 1, %s12
      %p115 = scmp.lt.s32.totalorder %s12, 3
      %p116 = pnand %p114, %p115
      %p117 = pneg %p116
      // Predicated region
      $region9: #{tpu_custom_call.1} parent=5 // pred_check
        _
      $region10: #{tpu_custom_call.1} parent=5 // pred_check_branch
        %119 = sbr.rel (%p116) target = $region12
      $region11: #{tpu_custom_call.1} parent=5 // pred_region
        %s120 = ssub.s32 %s12, 1
        // Predicated region
        $region13: #{tpu_custom_call.1} parent=11 // pred_check
          %p121 = pneg %p59
        $region14: #{tpu_custom_call.1} parent=11 // pred_check_branch
          %123 = sbr.rel (%p121) target = $region16
        $region15: #{tpu_custom_call.1} parent=11 // pred_region
          _
        $region16: #{tpu_custom_call.1} parent=11 // pred_fallthru
          _
        // Predicated region
        $region17: #{tpu_custom_call.1} parent=11 // pred_check
          %p124 = pneg %p80
        $region18: #{tpu_custom_call.1} parent=11 // pred_check_branch
          %126 = sbr.rel (%p124) target = $region20
        $region19: #{tpu_custom_call.1} parent=11 // pred_region
          _
        $region20: #{tpu_custom_call.1} parent=11 // pred_fallthru
          _
      $region12: #{tpu_custom_call.1} parent=5 // pred_fallthru
        _
      %p127 = scmp.lt.s32.totalorder %s12, 2
      // Predicated region
      $region21: #{tpu_custom_call.1} parent=5 // pred_check
        %p128 = pneg %p127
      $region22: #{tpu_custom_call.1} parent=5 // pred_check_branch
        %130 = sbr.rel (%p128) target = $region24
      $region23: #{tpu_custom_call.1} parent=5 // pred_region
        // Predicated region
        $region25: #{tpu_custom_call.1} parent=23 // pred_check
          %p131 = pneg %p32
        $region26: #{tpu_custom_call.1} parent=23 // pred_check_branch
          %133 = sbr.rel (%p131) target = $region28
        $region27: #{tpu_custom_call.1} parent=23 // pred_region
          %p134 = scmp.lt.s32.totalorder %s12, 1
          %s135 = scalar_select %p134, %s12, 1
          %s136 = smul.addr %s135, 8
          %s137 = smul.addr %s136, 8
          %s138 = scalar_lea.vmem %s0, %s137
        $region28: #{tpu_custom_call.1} parent=23 // pred_fallthru
          _
      $region24: #{tpu_custom_call.1} parent=5 // pred_fallthru
        _
      %p139 = scmp.le.s32.totalorder 1, %s12
      %p140 = scmp.lt.s32.totalorder %s12, 3
      %p141 = pnand %p139, %p140
      %p142 = pneg %p141
      // Predicated region
      $region29: #{tpu_custom_call.1} parent=5 // pred_check
        _
      $region30: #{tpu_custom_call.1} parent=5 // pred_check_branch
        %144 = sbr.rel (%p141) target = $region32
      $region31: #{tpu_custom_call.1} parent=5 // pred_region
        %s145 = ssub.s32 %s12, 1
        %p146 = scmp.lt.s32.totalorder %s17, 1
        %s147 = scalar_select %p146, %s17, 1
        %s148 = smul.addr %s147, 8
        %s149 = smul.addr %s148, 8
        %s150 = scalar_lea.vmem %s0, %s149
        %p151 = pneg %p38
        %p152 = pneg %p35
        %p153 = pneg %p59
        %p154 = pneg %p56
        %p155 = pneg %p80
        %p156 = pneg %p77
        %p157 = pneg %p106
        %p158 = pneg %p103
        %s159 = sand.u32 %s93, 1
        %s160 = scalar_lea.sflag [#allocation3], %s159
        %s161 = sand.u32 %s93, 1
        %s162 = smul.addr %s161, 24
        %s163 = scalar_lea.vmem [#allocation2], %s162
        %p164 = scmp.lt.s32.totalorder %s17, 1
        %s165 = scalar_select %p164, %s17, 1
        %s166 = smul.addr %s165, 8
        %s167 = smul.addr %s166, 8
        %s168 = scalar_lea.vmem %s0, %s167
        %v169 = vld [vmem:[%s168] sm:$0xff]
        %v170 = vld [vmem:[%s168 + $0x8] sm:$0xff]
        %v171 = vld [vmem:[%s168 + $0x10] sm:$0xff]
        %v172 = vld [vmem:[%s168 + $0x20] sm:$0xf]
        %v173 = vld [vmem:[%s168 + $0x28] sm:$0xf]
        %v174 = vld [vmem:[%s168 + $0x30] sm:$0xf]
        %v175 = vld [vmem:[%s1] sm:$0xff]
        %v176 = vld [vmem:[%s168 + $0x18] sm:$0xff]
        %v177 = vld [vmem:[%s168 + $0x38] sm:$0xf]
        %s178 = scalar_lea.vmem %s1, 8
        %v179 = vld [vmem:[%s178] sm:$0xff]
        %188 = vrot.lane.b32.xlu0 %v169, 127
        %v189 = vpop.permute.xlu0 %188
        %190 = vrot.lane.b32.xlu0 %v170, 127
        %v191 = vpop.permute.xlu0 %190
        %192 = vrot.lane.b32.xlu0 %v171, 127
        %v193 = vpop.permute.xlu0 %192
        %194 = vrot.lane.b32.xlu0 %v176, 127
        %v195 = vpop.permute.xlu0 %194
        %196 = vrot.lane.b32.xlu0 %v172, 127
        %v197 = vpop.permute.xlu0 %196
        %198 = vrot.lane.b32.xlu0 %v173, 127
        %v199 = vpop.permute.xlu0 %198
        %200 = vrot.lane.b32.xlu0 %v174, 127
        %v201 = vpop.permute.xlu0 %200
        %202 = vrot.lane.b32.xlu0 %v177, 127
        %v203 = vpop.permute.xlu0 %202
        %vm204 = vcmask 1039360
        %v205 = vsel %vm204, %v189, %v191
        %v206 = vsel %vm204, %v191, %v193
        %v207 = vsel %vm204, %v193, %v195
        %v208 = vsel %vm204, %v197, %v199
        %v209 = vsel %vm204, %v199, %v201
        %v210 = vsel %vm204, %v201, %v203
        %vm214 = vcmask 97280
        %v216 = vsel %vm214, %v179, 0
        %vm218 = vcmask 1043456
        %v219 = vsel %vm218, %v208, 0
        %v221 = vsel %vm218, %v209, 0
        %v223 = vsel %vm218, %v210, 0
        %225 = vmatprep.subr.mxu0 0.0
        %226 = vmatpush1.msra.mxu0 0.0
        %227 = vmatprep.subr.mxu0 0.0
        %228 = vmatpush1.msra.mxu0 0.0
        %229 = vmatprep.subr.mxu0 0.0
        %230 = vmatpush1.msra.mxu0 0.0
        %231 = vmatprep.subr.mxu0 0.0
        %232 = vmatpush1.msra.mxu0 0.0
        %233 = vmatprep.subr.mxu0 0.0
        %234 = vmatpush1.msra.mxu0 0.0
        %235 = vmatprep.subr.mxu0 0.0
        %236 = vmatpush1.msra.mxu0 0.0
        %237 = vmatprep.subr.mxu0 0.0
        %238 = vmatpush1.msra.mxu0 0.0
        %239 = vmatprep.subr.mxu0 0.0
        %240 = vmatpush1.msra.mxu0 0.0
        %241 = vmatprep.subr.mxu0 0.0
        %242 = vmatpush1.msra.mxu0 0.0
        %243 = vmatprep.subr.mxu0 0.0
        %244 = vmatpush1.msra.mxu0 0.0
        %245 = vmatprep.subr.mxu0 0.0
        %246 = vmatpush1.msra.mxu0 0.0
        %247 = vmatprep.subr.mxu0 0.0
        %248 = vmatpush1.msra.mxu0 0.0
        %249 = vmatprep.subr.mxu0 0.0
        %250 = vmatpush1.msra.mxu0 0.0
        %251 = vmatprep.subr.mxu0 0.0
        %252 = vmatpush1.msra.mxu0 0.0
        %253 = vmatprep.subr.mxu0 %v221
        %254 = vmatpush1.msra.mxu0 %v219
        %255 = vmatprep.subr.mxu0 %v206
        %256 = vmatpush1.msra.mxu0 %v205
        %257 = vmatprep.subr.mxu0 0.0
        %258 = vmatpush2.msra.mxu0 0.0
        %259 = vmatprep.subr.mxu0 0.0
        %260 = vmatpush2.msra.mxu0 0.0
        %261 = vmatprep.subr.mxu0 0.0
        %262 = vmatpush2.msra.mxu0 0.0
        %263 = vmatprep.subr.mxu0 0.0
        %264 = vmatpush2.msra.mxu0 0.0
        %265 = vmatprep.subr.mxu0 0.0
        %266 = vmatpush2.msra.mxu0 0.0
        %267 = vmatprep.subr.mxu0 0.0
        %268 = vmatpush2.msra.mxu0 0.0
        %269 = vmatprep.subr.mxu0 0.0
        %270 = vmatpush2.msra.mxu0 0.0
        %271 = vmatprep.subr.mxu0 0.0
        %272 = vmatpush2.msra.mxu0 0.0
        %273 = vmatprep.subr.mxu0 0.0
        %274 = vmatpush2.msra.mxu0 0.0
        %275 = vmatprep.subr.mxu0 0.0
        %276 = vmatpush2.msra.mxu0 0.0
        %277 = vmatprep.subr.mxu0 0.0
        %278 = vmatpush2.msra.mxu0 0.0
        %279 = vmatprep.subr.mxu0 0.0
        %280 = vmatpush2.msra.mxu0 0.0
        %281 = vmatprep.subr.mxu0 0.0
        %282 = vmatpush2.msra.mxu0 0.0
        %283 = vmatprep.subr.mxu0 0.0
        %284 = vmatpush2.msra.mxu0 0.0
        %285 = vmatprep.subr.mxu0 0.0
        %286 = vmatpush2.msra.mxu0 0.0
        %287 = vmatprep.subr.mxu0 0.0
        %288 = vmatpush2.msra.mxu0 0.0
        %289 = vmatprep.mubr.f32.mxu0 0.0
        %290 = vmatmul.mubr.f32.gmra.mxu0 %v216
        %v291 = vpop.f32.mrf.mxu0
        %v292 = vadd.f32 0.0, %v291
        %v293 = vpop.f32.mrf.mxu0
        %v294 = vadd.f32 0.0, %v293
        %295 = vdwg.mxu0
        %296 = vmatprep.subr.mxu0 0.0
        %297 = vmatpush1.msra.mxu0 0.0
        %298 = vmatprep.subr.mxu0 0.0
        %299 = vmatpush1.msra.mxu0 0.0
        %300 = vmatprep.subr.mxu0 0.0
        %301 = vmatpush1.msra.mxu0 0.0
        %302 = vmatprep.subr.mxu0 0.0
        %303 = vmatpush1.msra.mxu0 0.0
        %304 = vmatprep.subr.mxu0 0.0
        %305 = vmatpush1.msra.mxu0 0.0
        %306 = vmatprep.subr.mxu0 0.0
        %307 = vmatpush1.msra.mxu0 0.0
        %308 = vmatprep.subr.mxu0 0.0
        %309 = vmatpush1.msra.mxu0 0.0
        %310 = vmatprep.subr.mxu0 0.0
        %311 = vmatpush1.msra.mxu0 0.0
        %312 = vmatprep.subr.mxu0 0.0
        %313 = vmatpush1.msra.mxu0 0.0
        %314 = vmatprep.subr.mxu0 0.0
        %315 = vmatpush1.msra.mxu0 0.0
        %316 = vmatprep.subr.mxu0 0.0
        %317 = vmatpush1.msra.mxu0 0.0
        %318 = vmatprep.subr.mxu0 0.0
        %319 = vmatpush1.msra.mxu0 0.0
        %320 = vmatprep.subr.mxu0 0.0
        %321 = vmatpush1.msra.mxu0 0.0
        %322 = vmatprep.subr.mxu0 0.0
        %323 = vmatpush1.msra.mxu0 0.0
        %324 = vmatprep.subr.mxu0 0.0
        %325 = vmatpush1.msra.mxu0 %v223
        %326 = vmatprep.subr.mxu0 0.0
        %327 = vmatpush1.msra.mxu0 %v207
        %328 = vmatprep.subr.mxu0 0.0
        %329 = vmatpush2.msra.mxu0 0.0
        %330 = vmatprep.subr.mxu0 0.0
        %331 = vmatpush2.msra.mxu0 0.0
        %332 = vmatprep.subr.mxu0 0.0
        %333 = vmatpush2.msra.mxu0 0.0
        %334 = vmatprep.subr.mxu0 0.0
        %335 = vmatpush2.msra.mxu0 0.0
        %336 = vmatprep.subr.mxu0 0.0
        %337 = vmatpush2.msra.mxu0 0.0
        %338 = vmatprep.subr.mxu0 0.0
        %339 = vmatpush2.msra.mxu0 0.0
        %340 = vmatprep.subr.mxu0 0.0
        %341 = vmatpush2.msra.mxu0 0.0
        %342 = vmatprep.subr.mxu0 0.0
        %343 = vmatpush2.msra.mxu0 0.0
        %344 = vmatprep.subr.mxu0 0.0
        %345 = vmatpush2.msra.mxu0 0.0
        %346 = vmatprep.subr.mxu0 0.0
        %347 = vmatpush2.msra.mxu0 0.0
        %348 = vmatprep.subr.mxu0 0.0
        %349 = vmatpush2.msra.mxu0 0.0
        %350 = vmatprep.subr.mxu0 0.0
        %351 = vmatpush2.msra.mxu0 0.0
        %352 = vmatprep.subr.mxu0 0.0
        %353 = vmatpush2.msra.mxu0 0.0
        %354 = vmatprep.subr.mxu0 0.0
        %355 = vmatpush2.msra.mxu0 0.0
        %356 = vmatprep.subr.mxu0 0.0
        %357 = vmatpush2.msra.mxu0 0.0
        %358 = vmatprep.subr.mxu0 0.0
        %359 = vmatpush2.msra.mxu0 0.0
        %360 = vmatprep.mubr.f32.mxu0 0.0
        %361 = vmatmul.mubr.f32.gmra.mxu0 %v216
        %v362 = vpop.f32.mrf.mxu0
        %v363 = vadd.f32 0.0, %v362
        %v364 = vpop.f32.mrf.mxu0
        %365 = vdwg.mxu0
        %v367 = vsel %vm214, %v175, 0
        %v369 = vsel %vm218, %v172, 0
        %v371 = vsel %vm218, %v173, 0
        %v373 = vsel %vm218, %v174, 0
        %375 = vmatprep.subr.mxu0 0.0
        %376 = vmatpush1.msra.mxu0 0.0
        %377 = vmatprep.subr.mxu0 0.0
        %378 = vmatpush1.msra.mxu0 0.0
        %379 = vmatprep.subr.mxu0 0.0
        %380 = vmatpush1.msra.mxu0 0.0
        %381 = vmatprep.subr.mxu0 0.0
        %382 = vmatpush1.msra.mxu0 0.0
        %383 = vmatprep.subr.mxu0 0.0
        %384 = vmatpush1.msra.mxu0 0.0
        %385 = vmatprep.subr.mxu0 0.0
        %386 = vmatpush1.msra.mxu0 0.0
        %387 = vmatprep.subr.mxu0 0.0
        %388 = vmatpush1.msra.mxu0 0.0
        %389 = vmatprep.subr.mxu0 0.0
        %390 = vmatpush1.msra.mxu0 0.0
        %391 = vmatprep.subr.mxu0 0.0
        %392 = vmatpush1.msra.mxu0 0.0
        %393 = vmatprep.subr.mxu0 0.0
        %394 = vmatpush1.msra.mxu0 0.0
        %395 = vmatprep.subr.mxu0 0.0
        %396 = vmatpush1.msra.mxu0 0.0
        %397 = vmatprep.subr.mxu0 0.0
        %398 = vmatpush1.msra.mxu0 0.0
        %399 = vmatprep.subr.mxu0 0.0
        %400 = vmatpush1.msra.mxu0 0.0
        %401 = vmatprep.subr.mxu0 0.0
        %402 = vmatpush1.msra.mxu0 0.0
        %403 = vmatprep.subr.mxu0 %v371
        %404 = vmatpush1.msra.mxu0 %v369
        %405 = vmatprep.subr.mxu0 %v170
        %406 = vmatpush1.msra.mxu0 %v169
        %407 = vmatprep.subr.mxu0 0.0
        %408 = vmatpush2.msra.mxu0 0.0
        %409 = vmatprep.subr.mxu0 0.0
        %410 = vmatpush2.msra.mxu0 0.0
        %411 = vmatprep.subr.mxu0 0.0
        %412 = vmatpush2.msra.mxu0 0.0
        %413 = vmatprep.subr.mxu0 0.0
        %414 = vmatpush2.msra.mxu0 0.0
        %415 = vmatprep.subr.mxu0 0.0
        %416 = vmatpush2.msra.mxu0 0.0
        %417 = vmatprep.subr.mxu0 0.0
        %418 = vmatpush2.msra.mxu0 0.0
        %419 = vmatprep.subr.mxu0 0.0
        %420 = vmatpush2.msra.mxu0 0.0
        %421 = vmatprep.subr.mxu0 0.0
        %422 = vmatpush2.msra.mxu0 0.0
        %423 = vmatprep.subr.mxu0 0.0
        %424 = vmatpush2.msra.mxu0 0.0
        %425 = vmatprep.subr.mxu0 0.0
        %426 = vmatpush2.msra.mxu0 0.0
        %427 = vmatprep.subr.mxu0 0.0
        %428 = vmatpush2.msra.mxu0 0.0
        %429 = vmatprep.subr.mxu0 0.0
        %430 = vmatpush2.msra.mxu0 0.0
        %431 = vmatprep.subr.mxu0 0.0
        %432 = vmatpush2.msra.mxu0 0.0
        %433 = vmatprep.subr.mxu0 0.0
        %434 = vmatpush2.msra.mxu0 0.0
        %435 = vmatprep.subr.mxu0 0.0
        %436 = vmatpush2.msra.mxu0 0.0
        %437 = vmatprep.subr.mxu0 0.0
        %438 = vmatpush2.msra.mxu0 0.0
        %439 = vmatprep.mubr.f32.mxu0 0.0
        %440 = vmatmul.mubr.f32.gmra.mxu0 %v367
        %v441 = vpop.f32.mrf.mxu0
        %v442 = vadd.f32 %v292, %v441
        %v443 = vpop.f32.mrf.mxu0
        %v444 = vadd.f32 %v294, %v443
        %445 = vdwg.mxu0
        %446 = vmatprep.subr.mxu0 0.0
        %447 = vmatpush1.msra.mxu0 0.0
        %448 = vmatprep.subr.mxu0 0.0
        %449 = vmatpush1.msra.mxu0 0.0
        %450 = vmatprep.subr.mxu0 0.0
        %451 = vmatpush1.msra.mxu0 0.0
        %452 = vmatprep.subr.mxu0 0.0
        %453 = vmatpush1.msra.mxu0 0.0
        %454 = vmatprep.subr.mxu0 0.0
        %455 = vmatpush1.msra.mxu0 0.0
        %456 = vmatprep.subr.mxu0 0.0
        %457 = vmatpush1.msra.mxu0 0.0
        %458 = vmatprep.subr.mxu0 0.0
        %459 = vmatpush1.msra.mxu0 0.0
        %460 = vmatprep.subr.mxu0 0.0
        %461 = vmatpush1.msra.mxu0 0.0
        %462 = vmatprep.subr.mxu0 0.0
        %463 = vmatpush1.msra.mxu0 0.0
        %464 = vmatprep.subr.mxu0 0.0
        %465 = vmatpush1.msra.mxu0 0.0
        %466 = vmatprep.subr.mxu0 0.0
        %467 = vmatpush1.msra.mxu0 0.0
        %468 = vmatprep.subr.mxu0 0.0
        %469 = vmatpush1.msra.mxu0 0.0
        %470 = vmatprep.subr.mxu0 0.0
        %471 = vmatpush1.msra.mxu0 0.0
        %472 = vmatprep.subr.mxu0 0.0
        %473 = vmatpush1.msra.mxu0 0.0
        %474 = vmatprep.subr.mxu0 0.0
        %475 = vmatpush1.msra.mxu0 %v373
        %476 = vmatprep.subr.mxu0 0.0
        %477 = vmatpush1.msra.mxu0 %v171
        %478 = vmatprep.subr.mxu0 0.0
        %479 = vmatpush2.msra.mxu0 0.0
        %480 = vmatprep.subr.mxu0 0.0
        %481 = vmatpush2.msra.mxu0 0.0
        %482 = vmatprep.subr.mxu0 0.0
        %483 = vmatpush2.msra.mxu0 0.0
        %484 = vmatprep.subr.mxu0 0.0
        %485 = vmatpush2.msra.mxu0 0.0
        %486 = vmatprep.subr.mxu0 0.0
        %487 = vmatpush2.msra.mxu0 0.0
        %488 = vmatprep.subr.mxu0 0.0
        %489 = vmatpush2.msra.mxu0 0.0
        %490 = vmatprep.subr.mxu0 0.0
        %491 = vmatpush2.msra.mxu0 0.0
        %492 = vmatprep.subr.mxu0 0.0
        %493 = vmatpush2.msra.mxu0 0.0
        %494 = vmatprep.subr.mxu0 0.0
        %495 = vmatpush2.msra.mxu0 0.0
        %496 = vmatprep.subr.mxu0 0.0
        %497 = vmatpush2.msra.mxu0 0.0
        %498 = vmatprep.subr.mxu0 0.0
        %499 = vmatpush2.msra.mxu0 0.0
        %500 = vmatprep.subr.mxu0 0.0
        %501 = vmatpush2.msra.mxu0 0.0
        %502 = vmatprep.subr.mxu0 0.0
        %503 = vmatpush2.msra.mxu0 0.0
        %504 = vmatprep.subr.mxu0 0.0
        %505 = vmatpush2.msra.mxu0 0.0
        %506 = vmatprep.subr.mxu0 0.0
        %507 = vmatpush2.msra.mxu0 0.0
        %508 = vmatprep.subr.mxu0 0.0
        %509 = vmatpush2.msra.mxu0 0.0
        %510 = vmatprep.mubr.f32.mxu0 0.0
        %511 = vmatmul.mubr.f32.gmra.mxu0 %v367
        %v512 = vpop.f32.mrf.mxu0
        %v513 = vadd.f32 %v363, %v512
        %v514 = vpop.f32.mrf.mxu0
        %515 = vdwg.mxu0
        %s516 = scalar_lea.vmem %s1, 16
        %v517 = vld [vmem:[%s516] sm:$0xff]
        %518 = vrot.lane.b32.xlu0 %v169, 126
        %v519 = vpop.permute.xlu0 %518
        %520 = vrot.lane.b32.xlu0 %v170, 126
        %v521 = vpop.permute.xlu0 %520
        %522 = vrot.lane.b32.xlu0 %v171, 126
        %v523 = vpop.permute.xlu0 %522
        %524 = vrot.lane.b32.xlu0 %v176, 126
        %v525 = vpop.permute.xlu0 %524
        %526 = vrot.lane.b32.xlu0 %v172, 126
        %v527 = vpop.permute.xlu0 %526
        %528 = vrot.lane.b32.xlu0 %v173, 126
        %v529 = vpop.permute.xlu0 %528
        %530 = vrot.lane.b32.xlu0 %v174, 126
        %v531 = vpop.permute.xlu0 %530
        %532 = vrot.lane.b32.xlu0 %v177, 126
        %v533 = vpop.permute.xlu0 %532
        %vm534 = vcmask 1031168
        %v535 = vsel %vm534, %v519, %v521
        %v536 = vsel %vm534, %v521, %v523
        %v537 = vsel %vm534, %v523, %v525
        %v538 = vsel %vm534, %v527, %v529
        %v539 = vsel %vm534, %v529, %v531
        %v540 = vsel %vm534, %v531, %v533
        %v545 = vsel %vm214, %v517, 0
        %v547 = vsel %vm218, %v538, 0
        %v549 = vsel %vm218, %v539, 0
        %v551 = vsel %vm218, %v540, 0
        %553 = vmatprep.subr.mxu0 0.0
        %554 = vmatpush1.msra.mxu0 0.0
        %555 = vmatprep.subr.mxu0 0.0
        %556 = vmatpush1.msra.mxu0 0.0
        %557 = vmatprep.subr.mxu0 0.0
        %558 = vmatpush1.msra.mxu0 0.0
        %559 = vmatprep.subr.mxu0 0.0
        %560 = vmatpush1.msra.mxu0 0.0
        %561 = vmatprep.subr.mxu0 0.0
        %562 = vmatpush1.msra.mxu0 0.0
        %563 = vmatprep.subr.mxu0 0.0
        %564 = vmatpush1.msra.mxu0 0.0
        %565 = vmatprep.subr.mxu0 0.0
        %566 = vmatpush1.msra.mxu0 0.0
        %567 = vmatprep.subr.mxu0 0.0
        %568 = vmatpush1.msra.mxu0 0.0
        %569 = vmatprep.subr.mxu0 0.0
        %570 = vmatpush1.msra.mxu0 0.0
        %571 = vmatprep.subr.mxu0 0.0
        %572 = vmatpush1.msra.mxu0 0.0
        %573 = vmatprep.subr.mxu0 0.0
        %574 = vmatpush1.msra.mxu0 0.0
        %575 = vmatprep.subr.mxu0 0.0
        %576 = vmatpush1.msra.mxu0 0.0
        %577 = vmatprep.subr.mxu0 0.0
        %578 = vmatpush1.msra.mxu0 0.0
        %579 = vmatprep.subr.mxu0 0.0
        %580 = vmatpush1.msra.mxu0 0.0
        %581 = vmatprep.subr.mxu0 %v549
        %582 = vmatpush1.msra.mxu0 %v547
        %583 = vmatprep.subr.mxu0 %v536
        %584 = vmatpush1.msra.mxu0 %v535
        %585 = vmatprep.subr.mxu0 0.0
        %586 = vmatpush2.msra.mxu0 0.0
        %587 = vmatprep.subr.mxu0 0.0
        %588 = vmatpush2.msra.mxu0 0.0
        %589 = vmatprep.subr.mxu0 0.0
        %590 = vmatpush2.msra.mxu0 0.0
        %591 = vmatprep.subr.mxu0 0.0
        %592 = vmatpush2.msra.mxu0 0.0
        %593 = vmatprep.subr.mxu0 0.0
        %594 = vmatpush2.msra.mxu0 0.0
        %595 = vmatprep.subr.mxu0 0.0
        %596 = vmatpush2.msra.mxu0 0.0
        %597 = vmatprep.subr.mxu0 0.0
        %598 = vmatpush2.msra.mxu0 0.0
        %599 = vmatprep.subr.mxu0 0.0
        %600 = vmatpush2.msra.mxu0 0.0
        %601 = vmatprep.subr.mxu0 0.0
        %602 = vmatpush2.msra.mxu0 0.0
        %603 = vmatprep.subr.mxu0 0.0
        %604 = vmatpush2.msra.mxu0 0.0
        %605 = vmatprep.subr.mxu0 0.0
        %606 = vmatpush2.msra.mxu0 0.0
        %607 = vmatprep.subr.mxu0 0.0
        %608 = vmatpush2.msra.mxu0 0.0
        %609 = vmatprep.subr.mxu0 0.0
        %610 = vmatpush2.msra.mxu0 0.0
        %611 = vmatprep.subr.mxu0 0.0
        %612 = vmatpush2.msra.mxu0 0.0
        %613 = vmatprep.subr.mxu0 0.0
        %614 = vmatpush2.msra.mxu0 0.0
        %615 = vmatprep.subr.mxu0 0.0
        %616 = vmatpush2.msra.mxu0 0.0
        %617 = vmatprep.mubr.f32.mxu0 0.0
        %618 = vmatmul.mubr.f32.gmra.mxu0 %v545
        %v619 = vpop.f32.mrf.mxu0
        %v620 = vadd.f32 0.0, %v619
        %v621 = vpop.f32.mrf.mxu0
        %v622 = vadd.f32 0.0, %v621
        %623 = vdwg.mxu0
        %624 = vmatprep.subr.mxu0 0.0
        %625 = vmatpush1.msra.mxu0 0.0
        %626 = vmatprep.subr.mxu0 0.0
        %627 = vmatpush1.msra.mxu0 0.0
        %628 = vmatprep.subr.mxu0 0.0
        %629 = vmatpush1.msra.mxu0 0.0
        %630 = vmatprep.subr.mxu0 0.0
        %631 = vmatpush1.msra.mxu0 0.0
        %632 = vmatprep.subr.mxu0 0.0
        %633 = vmatpush1.msra.mxu0 0.0
        %634 = vmatprep.subr.mxu0 0.0
        %635 = vmatpush1.msra.mxu0 0.0
        %636 = vmatprep.subr.mxu0 0.0
        %637 = vmatpush1.msra.mxu0 0.0
        %638 = vmatprep.subr.mxu0 0.0
        %639 = vmatpush1.msra.mxu0 0.0
        %640 = vmatprep.subr.mxu0 0.0
        %641 = vmatpush1.msra.mxu0 0.0
        %642 = vmatprep.subr.mxu0 0.0
        %643 = vmatpush1.msra.mxu0 0.0
        %644 = vmatprep.subr.mxu0 0.0
        %645 = vmatpush1.msra.mxu0 0.0
        %646 = vmatprep.subr.mxu0 0.0
        %647 = vmatpush1.msra.mxu0 0.0
        %648 = vmatprep.subr.mxu0 0.0
        %649 = vmatpush1.msra.mxu0 0.0
        %650 = vmatprep.subr.mxu0 0.0
        %651 = vmatpush1.msra.mxu0 0.0
        %652 = vmatprep.subr.mxu0 0.0
        %653 = vmatpush1.msra.mxu0 %v551
        %654 = vmatprep.subr.mxu0 0.0
        %655 = vmatpush1.msra.mxu0 %v537
        %656 = vmatprep.subr.mxu0 0.0
        %657 = vmatpush2.msra.mxu0 0.0
        %658 = vmatprep.subr.mxu0 0.0
        %659 = vmatpush2.msra.mxu0 0.0
        %660 = vmatprep.subr.mxu0 0.0
        %661 = vmatpush2.msra.mxu0 0.0
        %662 = vmatprep.subr.mxu0 0.0
        %663 = vmatpush2.msra.mxu0 0.0
        %664 = vmatprep.subr.mxu0 0.0
        %665 = vmatpush2.msra.mxu0 0.0
        %666 = vmatprep.subr.mxu0 0.0
        %667 = vmatpush2.msra.mxu0 0.0
        %668 = vmatprep.subr.mxu0 0.0
        %669 = vmatpush2.msra.mxu0 0.0
        %670 = vmatprep.subr.mxu0 0.0
        %671 = vmatpush2.msra.mxu0 0.0
        %672 = vmatprep.subr.mxu0 0.0
        %673 = vmatpush2.msra.mxu0 0.0
        %674 = vmatprep.subr.mxu0 0.0
        %675 = vmatpush2.msra.mxu0 0.0
        %676 = vmatprep.subr.mxu0 0.0
        %677 = vmatpush2.msra.mxu0 0.0
        %678 = vmatprep.subr.mxu0 0.0
        %679 = vmatpush2.msra.mxu0 0.0
        %680 = vmatprep.subr.mxu0 0.0
        %681 = vmatpush2.msra.mxu0 0.0
        %682 = vmatprep.subr.mxu0 0.0
        %683 = vmatpush2.msra.mxu0 0.0
        %684 = vmatprep.subr.mxu0 0.0
        %685 = vmatpush2.msra.mxu0 0.0
        %686 = vmatprep.subr.mxu0 0.0
        %687 = vmatpush2.msra.mxu0 0.0
        %688 = vmatprep.mubr.f32.mxu0 0.0
        %689 = vmatmul.mubr.f32.gmra.mxu0 %v545
        %v690 = vpop.f32.mrf.mxu0
        %v691 = vadd.f32 0.0, %v690
        %v692 = vpop.f32.mrf.mxu0
        %693 = vdwg.mxu0
        %v694 = vadd.f32 %v442, %v620
        %v695 = vadd.f32 %v444, %v622
        %v696 = vadd.f32 %v513, %v691
        %v697 = vld [vmem:[%s2] sm:$0xff]
        %699 = vset.pattern.permute.xlu0 0
        %700 = vperm.xlu0 %699, %v697
        %v701 = vpop.permute.xlu0 %700
        %v703 = vadd.f32 %v694, %v701
        %v704 = vadd.f32 %v695, %v701
        %v705 = vadd.f32 %v696, %v701
        %vm706 = vcmp.ge.f32.partialorder %v703, 0.0
        %vm707 = vcmp.ge.f32.partialorder %v704, 0.0
        %vm708 = vcmp.ge.f32.partialorder %v705, 0.0
        %v709 = vmul.f32 %v703, 0.1
        %v710 = vmul.f32 %v704, 0.1
        %v711 = vmul.f32 %v705, 0.1
        %v712 = vsel %vm706, %v703, %v709
        %v713 = vsel %vm707, %v704, %v710
        %v714 = vsel %vm708, %v705, %v711
        %715 = vst [vmem:[%s163] sm:$0xff] %v712
        %716 = vst [vmem:[%s163 + $0x8] sm:$0xff] %v713
        %717 = vst [vmem:[%s163 + $0x10] sm:$0xff] %v714
        %s718 = sand.u32 %s93, 1
        %s719 = scalar_lea.sflag [#allocation3], %s718
        %s720 = sand.u32 %s93, 1
        %s721 = smul.addr %s720, 24
        %s722 = scalar_lea.vmem [#allocation2], %s721
        // Predicated region
        $region33: #{tpu_custom_call.1} parent=31 // pred_check
          %p723 = pneg %p103
        $region34: #{tpu_custom_call.1} parent=31 // pred_check_branch
          %725 = sbr.rel (%p723) target = $region36
        $region35: #{tpu_custom_call.1} parent=31 // pred_region
          %s727 = ssub.s32 384, 384
          %728 = vsyncadd %s719, %s727
          %s729 = smul.addr %s17, 3
          %s730 = smul.addr %s729, 128
          %s731 = scalar_lea.hbm %s3, %s730
          %s733 = sshll.u32 %s722, 4
          %s734 = int_to_ptr.vmem [resolvable:$true] %s733
          %736 = dma.vmem_to_hbm [thread:$0]  %s734, 384, %s731, %s719
        $region36: #{tpu_custom_call.1} parent=31 // pred_fallthru
          _
      $region32: #{tpu_custom_call.1} parent=5 // pred_fallthru
        _
      %p737 = scmp.le.s32.totalorder 2, %s12
      // Predicated region
      $region37: #{tpu_custom_call.1} parent=5 // pred_check
        %p738 = pneg %p737
      $region38: #{tpu_custom_call.1} parent=5 // pred_check_branch
        %740 = sbr.rel (%p738) target = $region40
      $region39: #{tpu_custom_call.1} parent=5 // pred_region
        %s741 = ssub.s32 %s12, 2
        // Predicated region
        $region41: #{tpu_custom_call.1} parent=39 // pred_check
          %p742 = pneg %p109
        $region42: #{tpu_custom_call.1} parent=39 // pred_check_branch
          %744 = sbr.rel (%p742) target = $region44
        $region43: #{tpu_custom_call.1} parent=39 // pred_region
          %s745 = sand.u32 %s94, 1
          %s746 = scalar_lea.sflag [#allocation3], %s745
          %s747 = sand.u32 %s94, 1
          %s748 = smul.addr %s747, 24
          %s749 = scalar_lea.vmem [#allocation2], %s748
          %750 = dma.done %s746, 384
        $region44: #{tpu_custom_call.1} parent=39 // pred_fallthru
          _
      $region40: #{tpu_custom_call.1} parent=5 // pred_fallthru
        _
    $region6: #{tpu_custom_call.1} parent=1 // loop_footer
      %s16 = sadd.s32 1, %s12
    $region7: #{tpu_custom_call.1} parent=1 // loop_footer_branch
      %11 = sbr.rel target = $region3
    $region8: #{tpu_custom_call.1} parent=1 // loop_exit
      _
    %751 = vsyncpa [#allocation3], 1
    %s752 = scalar_lea.sflag [#allocation3], 1
    %753 = vsyncpa %s752, 1

</llo_original>
